<compile_context>
chip_gen: v6e
topology: v6e:2x2x1
jax: 0.10.0
libtpu: 0.0.40
codegen_flags: <defaults>
</compile_context>

<pallas_src>
import math
import functools

import jax
import jax.numpy as jnp
from jax.experimental import pallas as pl
from jax.experimental.pallas import tpu as pltpu


def _round_up(x, m):
    return ((x + m - 1) // m) * m


# ---------------------------------------------------------------------------
# Path 1: table fully VMEM-resident -> one-hot MXU gather (table fetched once)
# ---------------------------------------------------------------------------
def _onehot_embed_kernel(ids_ref, tab_ref, out_ref, *, vocab, scale, precision):
    """One token block.

    ids_ref : (T, 1)   int32   token ids (tokens on sublanes)
    tab_ref : (Vp, D)  table   padded table, block index constant -> 1 HBM fetch
    out_ref : (T, D)   out     written once per block in the model dtype
    """
    t = ids_ref.shape[0]
    vocab_p = tab_ref.shape[0]

    # Clamp so an out-of-range id can never select an arbitrary row.
    ids = jnp.clip(ids_ref[...], 0, vocab - 1)                      # (T, 1)
    cols = jax.lax.broadcasted_iota(jnp.int32, (t, vocab_p), 1)     # (T, Vp)
    onehot = (ids == cols).astype(tab_ref.dtype)                    # exact {0,1}

    rows = jnp.dot(onehot, tab_ref[...],
                   preferred_element_type=jnp.float32,
                   precision=precision)                             # (T, D) f32

    # Finalize: scale + cast once per token block (not per chunk).
    out_ref[...] = (rows * scale).astype(out_ref.dtype)


# ---------------------------------------------------------------------------
# Path 2: table stays in HBM -> manual-DMA row gather driven by SMEM ids
# ---------------------------------------------------------------------------
def _gather_embed_kernel(ids_ref, tab_hbm, out_ref, gbuf, copy_sem, *,
                         tokens_per_block, vocab, scale):
    """One token block of `tokens_per_block` tokens.

    ids_ref  : (padded_n,) int32 in SMEM (scalar prefetch)
    tab_hbm  : (vocab, D) table ref in HBM (memory_space=pl.ANY)
    out_ref  : (T, D) output block in VMEM
    gbuf     : (T, D) VMEM gather buffer (scratch)
    copy_sem : (1,) DMA semaphore shared by the identically-sized row copies
    """
    i = pl.program_id(0)
    base = i * tokens_per_block

    # Issue all row DMAs up front so they overlap maximally.
    @pl.loop(0, tokens_per_block)
    def _(tok):
        row = jnp.clip(ids_ref[base + tok], 0, vocab - 1)
        pltpu.make_async_copy(tab_hbm.at[pl.ds(row, 1), :],
                              gbuf.at[pl.ds(tok, 1), :],
                              copy_sem.at[0]).start()

    # Wait for all of them (same-size copies sharing one semaphore).
    @pl.loop(0, tokens_per_block)
    def _(tok):
        pltpu.make_async_copy(tab_hbm.at[pl.ds(0, 1), :],
                              gbuf.at[pl.ds(tok, 1), :],
                              copy_sem.at[0]).wait()

    out_ref[...] = (gbuf[...].astype(jnp.float32) * scale).astype(out_ref.dtype)


# ---------------------------------------------------------------------------
# Wrapper
# ---------------------------------------------------------------------------
def weighted_embeddings(ids, table, *, out_dtype=None, token_block=256,
                        vmem_limit_bytes=None, use_gather=None):
    """ids: [batch, max_len] int32, table: [vocab, d_model] ->
       [batch, max_len, d_model] in the table dtype, scaled by sqrt(d_model)."""
    batch, max_len = ids.shape
    vocab, d_model = table.shape
    n = batch * max_len
    scale = float(math.sqrt(d_model))

    tab_isz = jnp.dtype(table.dtype).itemsize
    out_dtype = jnp.dtype(table.dtype) if out_dtype is None else jnp.dtype(out_dtype)
    out_isz = out_dtype.itemsize

    # Per-generation VMEM plan (128 MiB on v5e/v6e, 64 MiB per-TC on v7x).
    if vmem_limit_bytes is None:
        try:
            cap = pltpu.get_tpu_info().vmem_capacity_bytes
        except Exception:
            cap = 64 * 1024 * 1024
        vmem_limit_bytes = min(int(cap * 3 // 4), 100 * 1024 * 1024)

    token_block = max(8, (int(token_block) // 8) * 8)
    t = min(token_block, max(8, _round_up(n, 8)))

    flat_ids = ids.reshape(n).astype(jnp.int32)

    # Pad vocab to a multiple of 256 so the MXU contraction dim is tile-aligned
    # (also satisfies bf16 16-sublane packing).
    vocab_p = _round_up(vocab, 256)
    headroom = 2 * 1024 * 1024

    def _resident_plan_bytes(tb):
        return (2 * vocab_p * d_model * tab_isz      # double-buffered table block
                + 2 * tb * d_model * out_isz         # double-buffered out block
                + 2 * tb * 4                         # ids block
                + tb * vocab_p * tab_isz             # one-hot intermediate
                + tb * d_model * 4                   # f32 matmul result
                + headroom)

    if use_gather is None:
        use_gather = _resident_plan_bytes(t) > vmem_limit_bytes

    if not use_gather:
        # ------------------------- VMEM-resident path -----------------------
        while t > 8 and _resident_plan_bytes(t) > vmem_limit_bytes:
            t -= 8
        padded_n = _round_up(n, t)
        fids = flat_ids if padded_n == n else jnp.pad(flat_ids, (0, padded_n - n))
        ids2d = fids.reshape(padded_n, 1)

        tab_p = table if vocab_p == vocab else jnp.pad(
            table, ((0, vocab_p - vocab), (0, 0)))

        # HIGHEST (exact f32 reconstruction) only for f32 tables; bf16 one-hot
        # gather is already exact with a single default-precision MXU pass.
        precision = (jax.lax.Precision.HIGHEST
                     if table.dtype == jnp.float32 else None)

        out_flat = pl.pallas_call(
            functools.partial(_onehot_embed_kernel,
                              vocab=vocab, scale=scale, precision=precision),
            grid=(padded_n // t,),
            in_specs=[
                pl.BlockSpec((t, 1), lambda i: (i, 0)),            # token ids
                pl.BlockSpec((vocab_p, d_model), lambda i: (0, 0)),  # whole table
            ],
            out_specs=pl.BlockSpec((t, d_model), lambda i: (i, 0)),
            out_shape=jax.ShapeDtypeStruct((padded_n, d_model), out_dtype),
            compiler_params=pltpu.CompilerParams(
                dimension_semantics=("parallel",),
                vmem_limit_bytes=int(vmem_limit_bytes)),
            cost_estimate=pl.CostEstimate(
                flops=2 * padded_n * vocab_p * d_model,
                transcendentals=0,
                bytes_accessed=(vocab_p * d_model * tab_isz
                                + padded_n * 4
                                + padded_n * d_model * out_isz)),
        )(ids2d, tab_p)

    else:
        # --------------------------- row-gather path -------------------------
        # Fit gather buffer + double-buffered out block inside the VMEM budget;
        # shrinking the token block also covers very large d_model on v7x.
        t_g = min(t, 128)
        per_tok = d_model * (tab_isz + 2 * out_isz) + 8
        budget = max(1 * 1024 * 1024, vmem_limit_bytes - 4 * 1024 * 1024)
        t_g = max(8, min(t_g, (budget // per_tok) // 8 * 8))

        padded_n = _round_up(n, t_g)
        fids = flat_ids if padded_n == n else jnp.pad(flat_ids, (0, padded_n - n))

        grid_spec = pltpu.PrefetchScalarGridSpec(
            num_scalar_prefetch=1,
            grid=(padded_n // t_g,),
            in_specs=[pl.BlockSpec(memory_space=pl.ANY)],          # table in HBM
            out_specs=pl.BlockSpec((t_g, d_model), lambda i, ids_s: (i, 0)),
            scratch_shapes=[pltpu.VMEM((t_g, d_model), table.dtype),
                            pltpu.SemaphoreType.DMA((1,))],
        )

        out_flat = pl.pallas_call(
            functools.partial(_gather_embed_kernel,
                              tokens_per_block=t_g, vocab=vocab, scale=scale),
            grid_spec=grid_spec,
            out_shape=jax.ShapeDtypeStruct((padded_n, d_model), out_dtype),
            compiler_params=pltpu.CompilerParams(
                dimension_semantics=("parallel",),
                vmem_limit_bytes=int(vmem_limit_bytes)),
            cost_estimate=pl.CostEstimate(
                flops=padded_n * d_model,
                transcendentals=0,
                bytes_accessed=(padded_n * 4
                                + padded_n * d_model * tab_isz
                                + padded_n * d_model * out_isz)),
        )(fids, table)

    return out_flat[:n].reshape(batch, max_len, d_model)


if __name__ == "__main__":
    # Small deterministic setup consistent with the module:
    #   vocab=64, d_model=128, x: [batch=2, max_len=8]
    d_model, vocab = 128, 64
    batch, max_len = 2, 8

    key = jax.random.PRNGKey(0)
    k_w, k_ids = jax.random.split(key)
    # nn.Embedding default weight init is N(0, 1).
    table = jax.random.normal(k_w, (vocab, d_model), dtype=jnp.float32)
    ids = jax.random.randint(k_ids, (batch, max_len), 0, vocab, dtype=jnp.int32)

    # Pure-JAX reference.
    ref = table[ids] * math.sqrt(d_model)

    # Fast path: table VMEM-resident, one-hot MXU gather.
    out = jax.block_until_ready(weighted_embeddings(ids, table))
    assert out.shape == (batch, max_len, d_model)
    assert out.dtype == jnp.float32
    assert jnp.allclose(out, ref, atol=1e-5, rtol=1e-5)

    # Large-table path: manual-DMA row gather (forced here on small shapes so
    # both code paths are exercised and verified).
    out_g = jax.block_until_ready(weighted_embeddings(ids, table, use_gather=True))
    assert jnp.allclose(out_g, ref, atol=1e-5, rtol=1e-5)

    # TODO(synk): PyTorch nn.Embedding raises on out-of-range ids; this kernel
    # clamps them to [0, vocab-1] instead (no clean in-kernel error path).
    print("KERNEL_OK")
</pallas_src>

<mosaic_0001>
module attributes {stable_mosaic.version = 11 : i64} {
  func.func @_onehot_embed_kernel(%arg0: i32, %arg1: memref<16x1xi32, #tpu.memory_space<vmem>>, %arg2: memref<256x128xf32, #tpu.memory_space<vmem>>, %arg3: memref<16x128xf32, #tpu.memory_space<vmem>>) attributes {dimension_semantics = [#tpu.dimension_semantics<parallel>], iteration_bounds = array<i64: 1>, scalar_prefetch = 0 : i64, scratch_operands = 0 : i64, tpu.core_type = #tpu.core_type<tc>, window_params = [{transform_indices = @transform_0, window_bounds = array<i64: 16, 1>}, {pipeline_mode = #tpu.pipeline_mode<synchronous>, transform_indices = @transform_1, window_bounds = array<i64: 256, 128>}, {transform_indices = @transform_2, window_bounds = array<i64: 16, 128>}]} {
    %c0 = arith.constant 0 : index
    %c0_0 = arith.constant 0 : index
    %0 = vector.load %arg1[%c0, %c0_0] : memref<16x1xi32, #tpu.memory_space<vmem>>, vector<16x1xi32>
    %c0_i32 = arith.constant 0 : i32
    %c63_i32 = arith.constant 63 : i32
    %1 = vector.broadcast %c0_i32 : i32 to vector<16x1xi32>
    %2 = arith.maxsi %1, %0 : vector<16x1xi32>
    %3 = vector.broadcast %c63_i32 : i32 to vector<16x1xi32>
    %4 = arith.minsi %3, %2 : vector<16x1xi32>
    %5 = tpu.iota {dimensions = array<i32: 1>} : vector<16x256xi32>
    %6 = vector.broadcast %4 : vector<16x1xi32> to vector<16x256xi32>
    %7 = arith.cmpi eq, %6, %5 : vector<16x256xi32>
    %8 = arith.extui %7 : vector<16x256xi1> to vector<16x256xi32>
    %9 = arith.sitofp %8 : vector<16x256xi32> to vector<16x256xf32>
    %c0_1 = arith.constant 0 : index
    %c0_2 = arith.constant 0 : index
    %10 = vector.load %arg2[%c0_1, %c0_2] : memref<256x128xf32, #tpu.memory_space<vmem>>, vector<256x128xf32>
    %cst = arith.constant dense<0.000000e+00> : vector<16x128xf32>
    %11 = tpu.matmul %9, %10, %cst {dimension_numbers = #tpu.dot_dimension_numbers<[1], [0], [0], [1], [0, 0, 1, 1], [], []>, precision = #tpu.contract_precision<fp32>} : vector<16x256xf32>, vector<256x128xf32>, vector<16x128xf32> -> vector<16x128xf32>
    %cst_3 = arith.constant 11.3137083 : f32
    %12 = vector.broadcast %cst_3 : f32 to vector<16x128xf32>
    %13 = arith.mulf %11, %12 : vector<16x128xf32>
    %c0_4 = arith.constant 0 : index
    %c0_5 = arith.constant 0 : index
    %14 = vector.load %arg3[%c0_4, %c0_5] : memref<16x128xf32, #tpu.memory_space<vmem>>, vector<16x128xf32>
    tpu.vector_store %arg3[%c0_4, %c0_5], %13 {strides = array<i32>} : memref<16x128xf32, #tpu.memory_space<vmem>>, vector<16x128xf32>,
    return
  }
  func.func @transform_0(%arg0: i32) -> (i32, i32) {
    %c0_i32 = arith.constant 0 : i32
    %c0_i32_0 = arith.constant 0 : i32
    return %arg0, %c0_i32 : i32, i32
  }
  func.func @transform_1(%arg0: i32) -> (i32, i32) {
    %c0_i32 = arith.constant 0 : i32
    %c0_i32_0 = arith.constant 0 : i32
    %c0_i32_1 = arith.constant 0 : i32
    return %c0_i32, %c0_i32_0 : i32, i32
  }
  func.func @transform_2(%arg0: i32) -> (i32, i32) {
    %c0_i32 = arith.constant 0 : i32
    %c0_i32_0 = arith.constant 0 : i32
    return %arg0, %c0_i32 : i32, i32
  }
}

</mosaic_0001>

<llo_original>
// kernel: tpu_custom_call.1
$region0: #{tpu_custom_call.1}
  #allocation0 [shape = 'u32[]', space=smem, size = 0x4, offset = 0x4, fixed_abs, tag = 'smem constant byte address 0x4 - core index']
  #allocation1 [shape = 'u32[144,128]{1,0:T(1,128)}', space=vmem, size = 0x12000, scoped, tag = 'internal scratch']
  %s0 = inlined_call_operand.vmem [shape: s32[16,1], index: 0, kind: input, shape index: {}]
  %s1 = inlined_call_operand.hbm [shape: f32[256,128], index: 1, kind: input, shape index: {}]
  %s2 = inlined_call_operand.hbm [shape: f32[16,128], index: 2, kind: output, shape index: {}]
  %s3 = sld [smem:[#allocation0]]
  $region22: #{tpu_custom_call.1} parent=0
    _
  %s5 = ssub.s32 1, %s3
  %s6 = scalar_select 0, %s5, %s3
  $region1: #{tpu_custom_call.1} parent=0
    #allocation2 [shape = 'u8[131072]{0}', space=vmem, size = 0x20000, scoped, tag = 'input window, operand 1, single buffered']
    #allocation3 [shape = 's32[1]{0}', space=sflag, size = 0x4, scoped, tag = 'scoped memory for tpu_custom_call.1']
    #allocation4 [shape = 's32[1]{0}', space=sflag, size = 0x4, scoped, tag = 'scoped memory for tpu_custom_call.1']
    #allocation5 [shape = 'u8[8192]{0}', space=vmem, size = 0x2000, scoped, tag = 'output window, operand 0, single buffered']
    %7 = vsyncpa [#allocation3], 0
    %8 = vsyncpa [#allocation4], 0
    // Predicated region
    $region2: #{tpu_custom_call.1} parent=1 // pred_check
      _
    $region3: #{tpu_custom_call.1} parent=1 // pred_check_branch
      %10 = sbr.rel (0) target = $region5
    $region4: #{tpu_custom_call.1} parent=1 // pred_region
      _
    $region5: #{tpu_custom_call.1} parent=1 // pred_fallthru
      _
    // Predicated region
    $region6: #{tpu_custom_call.1} parent=1 // pred_check
      _
    $region7: #{tpu_custom_call.1} parent=1 // pred_check_branch
      %12 = sbr.rel (0) target = $region9
    $region8: #{tpu_custom_call.1} parent=1 // pred_region
      %s14 = ssub.s32 4096, 4096
      %15 = vsyncadd [#allocation3], %s14
      %s16 = sshll.u32 [#allocation2], 4
      %s17 = int_to_ptr.vmem [resolvable:$true] %s16
      %22 = dma.hbm_to_vmem [thread:$0]  %s1, 4096, %s17, [#allocation3], 128, 128, 8
    $region9: #{tpu_custom_call.1} parent=1 // pred_fallthru
      _
    // Predicated region
    $region10: #{tpu_custom_call.1} parent=1 // pred_check
      _
    $region11: #{tpu_custom_call.1} parent=1 // pred_check_branch
      %24 = sbr.rel (0) target = $region13
    $region12: #{tpu_custom_call.1} parent=1 // pred_region
      %25 = dma.done [#allocation3], 4096
    $region13: #{tpu_custom_call.1} parent=1 // pred_fallthru
      _
    %v26 = vld [vmem:[%s0] sm:$0xff]
    %v27 = vld [vmem:[%s0 + $0x8] sm:$0xff]
    %vm28 = vcmp.gt.s32.totalorder %v26, 0
    %v29 = vsel %vm28, %v26, 0
    %vm30 = vcmp.gt.s32.totalorder %v27, 0
    %v31 = vsel %vm30, %v27, 0
    %vm32 = vcmp.lt.s32.totalorder %v29, 63
    %v33 = vsel %vm32, %v29, 63
    %vm34 = vcmp.lt.s32.totalorder %v31, 63
    %v35 = vsel %vm34, %v31, 63
    %v36 = vlaneseq
    %v37 = vand.u32 %v36, 127
    %v38 = vadd.s32 %v37, 128
    %39 = vset.pattern.permute.xlu0 0
    %40 = vperm.xlu0 %39, %v33
    %v41 = vpop.permute.xlu0 %40
    %42 = vset.pattern.permute.xlu0 0
    %43 = vperm.xlu0 %42, %v35
    %v44 = vpop.permute.xlu0 %43
    %vm45 = vcmp.eq.s32.totalorder %v41, %v37
    %vm46 = vcmp.eq.s32.totalorder %v41, %v38
    %vm47 = vcmp.eq.s32.totalorder %v44, %v37
    %vm48 = vcmp.eq.s32.totalorder %v44, %v38
    %v49 = vsel %vm45, 1, 0
    %v50 = vsel %vm46, 1, 0
    %v51 = vsel %vm47, 1, 0
    %v52 = vsel %vm48, 1, 0
    %v53 = vcvt.s32.f32 %v49
    %v54 = vcvt.s32.f32 %v50
    %v55 = vcvt.s32.f32 %v51
    %v56 = vcvt.s32.f32 %v52
    %v57 = vld [vmem:[#allocation2] sm:$0xff]
    %v58 = vld [vmem:[#allocation2 + $0x8] sm:$0xff]
    %v59 = vld [vmem:[#allocation2 + $0x10] sm:$0xff]
    %v60 = vld [vmem:[#allocation2 + $0x18] sm:$0xff]
    %v61 = vld [vmem:[#allocation2 + $0x20] sm:$0xff]
    %v62 = vld [vmem:[#allocation2 + $0x28] sm:$0xff]
    %v63 = vld [vmem:[#allocation2 + $0x30] sm:$0xff]
    %v64 = vld [vmem:[#allocation2 + $0x38] sm:$0xff]
    %v65 = vld [vmem:[#allocation2 + $0x40] sm:$0xff]
    %v66 = vld [vmem:[#allocation2 + $0x48] sm:$0xff]
    %v67 = vld [vmem:[#allocation2 + $0x50] sm:$0xff]
    %v68 = vld [vmem:[#allocation2 + $0x58] sm:$0xff]
    %v69 = vld [vmem:[#allocation2 + $0x60] sm:$0xff]
    %v70 = vld [vmem:[#allocation2 + $0x68] sm:$0xff]
    %v71 = vld [vmem:[#allocation2 + $0x70] sm:$0xff]
    %v72 = vld [vmem:[#allocation2 + $0x78] sm:$0xff]
    %v73 = vld [vmem:[#allocation2 + $0x80] sm:$0xff]
    %v74 = vld [vmem:[#allocation2 + $0x88] sm:$0xff]
    %v75 = vld [vmem:[#allocation2 + $0x90] sm:$0xff]
    %v76 = vld [vmem:[#allocation2 + $0x98] sm:$0xff]
    %v77 = vld [vmem:[#allocation2 + $0xa0] sm:$0xff]
    %v78 = vld [vmem:[#allocation2 + $0xa8] sm:$0xff]
    %v79 = vld [vmem:[#allocation2 + $0xb0] sm:$0xff]
    %v80 = vld [vmem:[#allocation2 + $0xb8] sm:$0xff]
    %v81 = vld [vmem:[#allocation2 + $0xc0] sm:$0xff]
    %v82 = vld [vmem:[#allocation2 + $0xc8] sm:$0xff]
    %v83 = vld [vmem:[#allocation2 + $0xd0] sm:$0xff]
    %v84 = vld [vmem:[#allocation2 + $0xd8] sm:$0xff]
    %v85 = vld [vmem:[#allocation2 + $0xe0] sm:$0xff]
    %v86 = vld [vmem:[#allocation2 + $0xe8] sm:$0xff]
    %v87 = vld [vmem:[#allocation2 + $0xf0] sm:$0xff]
    %v88 = vld [vmem:[#allocation2 + $0xf8] sm:$0xff]
    %89 = vmatprep.subr.mxu0 0.0
    %v90 = vand.u32 %v72, 4294901760
    %91 = vmatpush1.msra.mxu0 %v90
    %92 = vmatprep.subr.mxu0 0.0
    %v93 = vand.u32 %v71, 4294901760
    %94 = vmatpush1.msra.mxu0 %v93
    %95 = vmatprep.subr.mxu0 0.0
    %v96 = vand.u32 %v70, 4294901760
    %97 = vmatpush1.msra.mxu0 %v96
    %98 = vmatprep.subr.mxu0 0.0
    %v99 = vand.u32 %v69, 4294901760
    %100 = vmatpush1.msra.mxu0 %v99
    %101 = vmatprep.subr.mxu0 0.0
    %v102 = vand.u32 %v68, 4294901760
    %103 = vmatpush1.msra.mxu0 %v102
    %104 = vmatprep.subr.mxu0 0.0
    %v105 = vand.u32 %v67, 4294901760
    %106 = vmatpush1.msra.mxu0 %v105
    %107 = vmatprep.subr.mxu0 0.0
    %v108 = vand.u32 %v66, 4294901760
    %109 = vmatpush1.msra.mxu0 %v108
    %110 = vmatprep.subr.mxu0 0.0
    %v111 = vand.u32 %v65, 4294901760
    %112 = vmatpush1.msra.mxu0 %v111
    %113 = vmatprep.subr.mxu0 0.0
    %v114 = vand.u32 %v64, 4294901760
    %115 = vmatpush1.msra.mxu0 %v114
    %116 = vmatprep.subr.mxu0 0.0
    %v117 = vand.u32 %v63, 4294901760
    %118 = vmatpush1.msra.mxu0 %v117
    %119 = vmatprep.subr.mxu0 0.0
    %v120 = vand.u32 %v62, 4294901760
    %121 = vmatpush1.msra.mxu0 %v120
    %122 = vmatprep.subr.mxu0 0.0
    %v123 = vand.u32 %v61, 4294901760
    %124 = vmatpush1.msra.mxu0 %v123
    %125 = vmatprep.subr.mxu0 0.0
    %v126 = vand.u32 %v60, 4294901760
    %127 = vmatpush1.msra.mxu0 %v126
    %128 = vmatprep.subr.mxu0 0.0
    %v129 = vand.u32 %v59, 4294901760
    %130 = vmatpush1.msra.mxu0 %v129
    %131 = vmatprep.subr.mxu0 0.0
    %v132 = vand.u32 %v58, 4294901760
    %133 = vmatpush1.msra.mxu0 %v132
    %134 = vmatprep.subr.mxu0 0.0
    %v135 = vand.u32 %v57, 4294901760
    %136 = vmatpush1.msra.mxu0 %v135
    %137 = vmatprep.subr.mxu0 0.0
    %v138 = vand.u32 %v88, 4294901760
    %139 = vmatpush2.msra.mxu0 %v138
    %140 = vmatprep.subr.mxu0 0.0
    %v141 = vand.u32 %v87, 4294901760
    %142 = vmatpush2.msra.mxu0 %v141
    %143 = vmatprep.subr.mxu0 0.0
    %v144 = vand.u32 %v86, 4294901760
    %145 = vmatpush2.msra.mxu0 %v144
    %146 = vmatprep.subr.mxu0 0.0
    %v147 = vand.u32 %v85, 4294901760
    %148 = vmatpush2.msra.mxu0 %v147
    %149 = vmatprep.subr.mxu0 0.0
    %v150 = vand.u32 %v84, 4294901760
    %151 = vmatpush2.msra.mxu0 %v150
    %152 = vmatprep.subr.mxu0 0.0
    %v153 = vand.u32 %v83, 4294901760
    %154 = vmatpush2.msra.mxu0 %v153
    %155 = vmatprep.subr.mxu0 0.0
    %v156 = vand.u32 %v82, 4294901760
    %157 = vmatpush2.msra.mxu0 %v156
    %158 = vmatprep.subr.mxu0 0.0
    %v159 = vand.u32 %v81, 4294901760
    %160 = vmatpush2.msra.mxu0 %v159
    %161 = vmatprep.subr.mxu0 0.0
    %v162 = vand.u32 %v80, 4294901760
    %163 = vmatpush2.msra.mxu0 %v162
    %164 = vmatprep.subr.mxu0 0.0
    %v165 = vand.u32 %v79, 4294901760
    %166 = vmatpush2.msra.mxu0 %v165
    %167 = vmatprep.subr.mxu0 0.0
    %v168 = vand.u32 %v78, 4294901760
    %169 = vmatpush2.msra.mxu0 %v168
    %170 = vmatprep.subr.mxu0 0.0
    %v171 = vand.u32 %v77, 4294901760
    %172 = vmatpush2.msra.mxu0 %v171
    %173 = vmatprep.subr.mxu0 0.0
    %v174 = vand.u32 %v76, 4294901760
    %175 = vmatpush2.msra.mxu0 %v174
    %176 = vmatprep.subr.mxu0 0.0
    %v177 = vand.u32 %v75, 4294901760
    %178 = vmatpush2.msra.mxu0 %v177
    %179 = vmatprep.subr.mxu0 0.0
    %v180 = vand.u32 %v74, 4294901760
    %181 = vmatpush2.msra.mxu0 %v180
    %182 = vmatprep.subr.mxu0 0.0
    %v183 = vand.u32 %v73, 4294901760
    %184 = vmatpush2.msra.mxu0 %v183
    %v185 = vand.u32 %v54, 4294901760
    %v186 = vsub.f32 %v54, %v185
    %v187 = vand.u32 %v186, 4294901760
    %v188 = vsub.f32 %v186, %v187
    %v189 = vand.u32 %v188, 4294901760
    %190 = vmatprep.mubr.f32.mxu0 %v189
    %v191 = vand.u32 %v53, 4294901760
    %v192 = vsub.f32 %v53, %v191
    %v193 = vand.u32 %v192, 4294901760
    %v194 = vsub.f32 %v192, %v193
    %v195 = vand.u32 %v194, 4294901760
    %196 = vmatmul.mubr.f32.gmra.mxu0 %v195
    %v197 = vpop.f32.mrf.mxu0
    %v198 = vadd.f32 0.0, %v197
    %v199 = vpop.f32.mrf.mxu0
    %v200 = vand.u32 %v56, 4294901760
    %v201 = vsub.f32 %v56, %v200
    %v202 = vand.u32 %v201, 4294901760
    %v203 = vsub.f32 %v201, %v202
    %v204 = vand.u32 %v203, 4294901760
    %205 = vmatprep.mubr.f32.mxu0 %v204
    %v206 = vand.u32 %v55, 4294901760
    %v207 = vsub.f32 %v55, %v206
    %v208 = vand.u32 %v207, 4294901760
    %v209 = vsub.f32 %v207, %v208
    %v210 = vand.u32 %v209, 4294901760
    %211 = vmatmul.mubr.f32.gmra.mxu0 %v210
    %v212 = vpop.f32.mrf.mxu0
    %v213 = vadd.f32 0.0, %v212
    %v214 = vpop.f32.mrf.mxu0
    %215 = vdwg.mxu0
    %216 = vmatprep.subr.mxu0 0.0
    %v217 = vand.u32 %v72, 4294901760
    %v218 = vsub.f32 %v72, %v217
    %v219 = vand.u32 %v218, 4294901760
    %v220 = vsub.f32 %v218, %v219
    %v221 = vand.u32 %v220, 4294901760
    %222 = vmatpush1.msra.mxu0 %v221
    %223 = vmatprep.subr.mxu0 0.0
    %v224 = vand.u32 %v71, 4294901760
    %v225 = vsub.f32 %v71, %v224
    %v226 = vand.u32 %v225, 4294901760
    %v227 = vsub.f32 %v225, %v226
    %v228 = vand.u32 %v227, 4294901760
    %229 = vmatpush1.msra.mxu0 %v228
    %230 = vmatprep.subr.mxu0 0.0
    %v231 = vand.u32 %v70, 4294901760
    %v232 = vsub.f32 %v70, %v231
    %v233 = vand.u32 %v232, 4294901760
    %v234 = vsub.f32 %v232, %v233
    %v235 = vand.u32 %v234, 4294901760
    %236 = vmatpush1.msra.mxu0 %v235
    %237 = vmatprep.subr.mxu0 0.0
    %v238 = vand.u32 %v69, 4294901760
    %v239 = vsub.f32 %v69, %v238
    %v240 = vand.u32 %v239, 4294901760
    %v241 = vsub.f32 %v239, %v240
    %v242 = vand.u32 %v241, 4294901760
    %243 = vmatpush1.msra.mxu0 %v242
    %244 = vmatprep.subr.mxu0 0.0
    %v245 = vand.u32 %v68, 4294901760
    %v246 = vsub.f32 %v68, %v245
    %v247 = vand.u32 %v246, 4294901760
    %v248 = vsub.f32 %v246, %v247
    %v249 = vand.u32 %v248, 4294901760
    %250 = vmatpush1.msra.mxu0 %v249
    %251 = vmatprep.subr.mxu0 0.0
    %v252 = vand.u32 %v67, 4294901760
    %v253 = vsub.f32 %v67, %v252
    %v254 = vand.u32 %v253, 4294901760
    %v255 = vsub.f32 %v253, %v254
    %v256 = vand.u32 %v255, 4294901760
    %257 = vmatpush1.msra.mxu0 %v256
    %258 = vmatprep.subr.mxu0 0.0
    %v259 = vand.u32 %v66, 4294901760
    %v260 = vsub.f32 %v66, %v259
    %v261 = vand.u32 %v260, 4294901760
    %v262 = vsub.f32 %v260, %v261
    %v263 = vand.u32 %v262, 4294901760
    %264 = vmatpush1.msra.mxu0 %v263
    %265 = vmatprep.subr.mxu0 0.0
    %v266 = vand.u32 %v65, 4294901760
    %v267 = vsub.f32 %v65, %v266
    %v268 = vand.u32 %v267, 4294901760
    %v269 = vsub.f32 %v267, %v268
    %v270 = vand.u32 %v269, 4294901760
    %271 = vmatpush1.msra.mxu0 %v270
    %272 = vmatprep.subr.mxu0 0.0
    %v273 = vand.u32 %v64, 4294901760
    %v274 = vsub.f32 %v64, %v273
    %v275 = vand.u32 %v274, 4294901760
    %v276 = vsub.f32 %v274, %v275
    %v277 = vand.u32 %v276, 4294901760
    %278 = vmatpush1.msra.mxu0 %v277
    %279 = vmatprep.subr.mxu0 0.0
    %v280 = vand.u32 %v63, 4294901760
    %v281 = vsub.f32 %v63, %v280
    %v282 = vand.u32 %v281, 4294901760
    %v283 = vsub.f32 %v281, %v282
    %v284 = vand.u32 %v283, 4294901760
    %285 = vmatpush1.msra.mxu0 %v284
    %286 = vmatprep.subr.mxu0 0.0
    %v287 = vand.u32 %v62, 4294901760
    %v288 = vsub.f32 %v62, %v287
    %v289 = vand.u32 %v288, 4294901760
    %v290 = vsub.f32 %v288, %v289
    %v291 = vand.u32 %v290, 4294901760
    %292 = vmatpush1.msra.mxu0 %v291
    %293 = vmatprep.subr.mxu0 0.0
    %v294 = vand.u32 %v61, 4294901760
    %v295 = vsub.f32 %v61, %v294
    %v296 = vand.u32 %v295, 4294901760
    %v297 = vsub.f32 %v295, %v296
    %v298 = vand.u32 %v297, 4294901760
    %299 = vmatpush1.msra.mxu0 %v298
    %300 = vmatprep.subr.mxu0 0.0
    %v301 = vand.u32 %v60, 4294901760
    %v302 = vsub.f32 %v60, %v301
    %v303 = vand.u32 %v302, 4294901760
    %v304 = vsub.f32 %v302, %v303
    %v305 = vand.u32 %v304, 4294901760
    %306 = vmatpush1.msra.mxu0 %v305
    %307 = vmatprep.subr.mxu0 0.0
    %v308 = vand.u32 %v59, 4294901760
    %v309 = vsub.f32 %v59, %v308
    %v310 = vand.u32 %v309, 4294901760
    %v311 = vsub.f32 %v309, %v310
    %v312 = vand.u32 %v311, 4294901760
    %313 = vmatpush1.msra.mxu0 %v312
    %314 = vmatprep.subr.mxu0 0.0
    %v315 = vand.u32 %v58, 4294901760
    %v316 = vsub.f32 %v58, %v315
    %v317 = vand.u32 %v316, 4294901760
    %v318 = vsub.f32 %v316, %v317
    %v319 = vand.u32 %v318, 4294901760
    %320 = vmatpush1.msra.mxu0 %v319
    %321 = vmatprep.subr.mxu0 0.0
    %v322 = vand.u32 %v57, 4294901760
    %v323 = vsub.f32 %v57, %v322
    %v324 = vand.u32 %v323, 4294901760
    %v325 = vsub.f32 %v323, %v324
    %v326 = vand.u32 %v325, 4294901760
    %327 = vmatpush1.msra.mxu0 %v326
    %328 = vmatprep.subr.mxu0 0.0
    %v329 = vand.u32 %v88, 4294901760
    %v330 = vsub.f32 %v88, %v329
    %v331 = vand.u32 %v330, 4294901760
    %v332 = vsub.f32 %v330, %v331
    %v333 = vand.u32 %v332, 4294901760
    %334 = vmatpush2.msra.mxu0 %v333
    %335 = vmatprep.subr.mxu0 0.0
    %v336 = vand.u32 %v87, 4294901760
    %v337 = vsub.f32 %v87, %v336
    %v338 = vand.u32 %v337, 4294901760
    %v339 = vsub.f32 %v337, %v338
    %v340 = vand.u32 %v339, 4294901760
    %341 = vmatpush2.msra.mxu0 %v340
    %342 = vmatprep.subr.mxu0 0.0
    %v343 = vand.u32 %v86, 4294901760
    %v344 = vsub.f32 %v86, %v343
    %v345 = vand.u32 %v344, 4294901760
    %v346 = vsub.f32 %v344, %v345
    %v347 = vand.u32 %v346, 4294901760
    %348 = vmatpush2.msra.mxu0 %v347
    %349 = vmatprep.subr.mxu0 0.0
    %v350 = vand.u32 %v85, 4294901760
    %v351 = vsub.f32 %v85, %v350
    %v352 = vand.u32 %v351, 4294901760
    %v353 = vsub.f32 %v351, %v352
    %v354 = vand.u32 %v353, 4294901760
    %355 = vmatpush2.msra.mxu0 %v354
    %356 = vmatprep.subr.mxu0 0.0
    %v357 = vand.u32 %v84, 4294901760
    %v358 = vsub.f32 %v84, %v357
    %v359 = vand.u32 %v358, 4294901760
    %v360 = vsub.f32 %v358, %v359
    %v361 = vand.u32 %v360, 4294901760
    %362 = vmatpush2.msra.mxu0 %v361
    %363 = vmatprep.subr.mxu0 0.0
    %v364 = vand.u32 %v83, 4294901760
    %v365 = vsub.f32 %v83, %v364
    %v366 = vand.u32 %v365, 4294901760
    %v367 = vsub.f32 %v365, %v366
    %v368 = vand.u32 %v367, 4294901760
    %369 = vmatpush2.msra.mxu0 %v368
    %370 = vmatprep.subr.mxu0 0.0
    %v371 = vand.u32 %v82, 4294901760
    %v372 = vsub.f32 %v82, %v371
    %v373 = vand.u32 %v372, 4294901760
    %v374 = vsub.f32 %v372, %v373
    %v375 = vand.u32 %v374, 4294901760
    %376 = vmatpush2.msra.mxu0 %v375
    %377 = vmatprep.subr.mxu0 0.0
    %v378 = vand.u32 %v81, 4294901760
    %v379 = vsub.f32 %v81, %v378
    %v380 = vand.u32 %v379, 4294901760
    %v381 = vsub.f32 %v379, %v380
    %v382 = vand.u32 %v381, 4294901760
    %383 = vmatpush2.msra.mxu0 %v382
    %384 = vmatprep.subr.mxu0 0.0
    %v385 = vand.u32 %v80, 4294901760
    %v386 = vsub.f32 %v80, %v385
    %v387 = vand.u32 %v386, 4294901760
    %v388 = vsub.f32 %v386, %v387
    %v389 = vand.u32 %v388, 4294901760
    %390 = vmatpush2.msra.mxu0 %v389
    %391 = vmatprep.subr.mxu0 0.0
    %v392 = vand.u32 %v79, 4294901760
    %v393 = vsub.f32 %v79, %v392
    %v394 = vand.u32 %v393, 4294901760
    %v395 = vsub.f32 %v393, %v394
    %v396 = vand.u32 %v395, 4294901760
    %397 = vmatpush2.msra.mxu0 %v396
    %398 = vmatprep.subr.mxu0 0.0
    %v399 = vand.u32 %v78, 4294901760
    %v400 = vsub.f32 %v78, %v399
    %v401 = vand.u32 %v400, 4294901760
    %v402 = vsub.f32 %v400, %v401
    %v403 = vand.u32 %v402, 4294901760
    %404 = vmatpush2.msra.mxu0 %v403
    %405 = vmatprep.subr.mxu0 0.0
    %v406 = vand.u32 %v77, 4294901760
    %v407 = vsub.f32 %v77, %v406
    %v408 = vand.u32 %v407, 4294901760
    %v409 = vsub.f32 %v407, %v408
    %v410 = vand.u32 %v409, 4294901760
    %411 = vmatpush2.msra.mxu0 %v410
    %412 = vmatprep.subr.mxu0 0.0
    %v413 = vand.u32 %v76, 4294901760
    %v414 = vsub.f32 %v76, %v413
    %v415 = vand.u32 %v414, 4294901760
    %v416 = vsub.f32 %v414, %v415
    %v417 = vand.u32 %v416, 4294901760
    %418 = vmatpush2.msra.mxu0 %v417
    %419 = vmatprep.subr.mxu0 0.0
    %v420 = vand.u32 %v75, 4294901760
    %v421 = vsub.f32 %v75, %v420
    %v422 = vand.u32 %v421, 4294901760
    %v423 = vsub.f32 %v421, %v422
    %v424 = vand.u32 %v423, 4294901760
    %425 = vmatpush2.msra.mxu0 %v424
    %426 = vmatprep.subr.mxu0 0.0
    %v427 = vand.u32 %v74, 4294901760
    %v428 = vsub.f32 %v74, %v427
    %v429 = vand.u32 %v428, 4294901760
    %v430 = vsub.f32 %v428, %v429
    %v431 = vand.u32 %v430, 4294901760
    %432 = vmatpush2.msra.mxu0 %v431
    %433 = vmatprep.subr.mxu0 0.0
    %v434 = vand.u32 %v73, 4294901760
    %v435 = vsub.f32 %v73, %v434
    %v436 = vand.u32 %v435, 4294901760
    %v437 = vsub.f32 %v435, %v436
    %v438 = vand.u32 %v437, 4294901760
    %439 = vmatpush2.msra.mxu0 %v438
    %v440 = vand.u32 %v54, 4294901760
    %441 = vmatprep.mubr.f32.mxu0 %v440
    %v442 = vand.u32 %v53, 4294901760
    %443 = vmatmul.mubr.f32.gmra.mxu0 %v442
    %v444 = vpop.f32.mrf.mxu0
    %v445 = vadd.f32 %v198, %v444
    %v446 = vpop.f32.mrf.mxu0
    %v447 = vand.u32 %v56, 4294901760
    %448 = vmatprep.mubr.f32.mxu0 %v447
    %v449 = vand.u32 %v55, 4294901760
    %450 = vmatmul.mubr.f32.gmra.mxu0 %v449
    %v451 = vpop.f32.mrf.mxu0
    %v452 = vadd.f32 %v213, %v451
    %v453 = vpop.f32.mrf.mxu0
    %454 = vdwg.mxu0
    %455 = vmatprep.subr.mxu0 0.0
    %v456 = vand.u32 %v72, 4294901760
    %v457 = vsub.f32 %v72, %v456
    %458 = vmatpush1.msra.mxu0 %v457
    %459 = vmatprep.subr.mxu0 0.0
    %v460 = vand.u32 %v71, 4294901760
    %v461 = vsub.f32 %v71, %v460
    %462 = vmatpush1.msra.mxu0 %v461
    %463 = vmatprep.subr.mxu0 0.0
    %v464 = vand.u32 %v70, 4294901760
    %v465 = vsub.f32 %v70, %v464
    %466 = vmatpush1.msra.mxu0 %v465
    %467 = vmatprep.subr.mxu0 0.0
    %v468 = vand.u32 %v69, 4294901760
    %v469 = vsub.f32 %v69, %v468
    %470 = vmatpush1.msra.mxu0 %v469
    %471 = vmatprep.subr.mxu0 0.0
    %v472 = vand.u32 %v68, 4294901760
    %v473 = vsub.f32 %v68, %v472
    %474 = vmatpush1.msra.mxu0 %v473
    %475 = vmatprep.subr.mxu0 0.0
    %v476 = vand.u32 %v67, 4294901760
    %v477 = vsub.f32 %v67, %v476
    %478 = vmatpush1.msra.mxu0 %v477
    %479 = vmatprep.subr.mxu0 0.0
    %v480 = vand.u32 %v66, 4294901760
    %v481 = vsub.f32 %v66, %v480
    %482 = vmatpush1.msra.mxu0 %v481
    %483 = vmatprep.subr.mxu0 0.0
    %v484 = vand.u32 %v65, 4294901760
    %v485 = vsub.f32 %v65, %v484
    %486 = vmatpush1.msra.mxu0 %v485
    %487 = vmatprep.subr.mxu0 0.0
    %v488 = vand.u32 %v64, 4294901760
    %v489 = vsub.f32 %v64, %v488
    %490 = vmatpush1.msra.mxu0 %v489
    %491 = vmatprep.subr.mxu0 0.0
    %v492 = vand.u32 %v63, 4294901760
    %v493 = vsub.f32 %v63, %v492
    %494 = vmatpush1.msra.mxu0 %v493
    %495 = vmatprep.subr.mxu0 0.0
    %v496 = vand.u32 %v62, 4294901760
    %v497 = vsub.f32 %v62, %v496
    %498 = vmatpush1.msra.mxu0 %v497
    %499 = vmatprep.subr.mxu0 0.0
    %v500 = vand.u32 %v61, 4294901760
    %v501 = vsub.f32 %v61, %v500
    %502 = vmatpush1.msra.mxu0 %v501
    %503 = vmatprep.subr.mxu0 0.0
    %v504 = vand.u32 %v60, 4294901760
    %v505 = vsub.f32 %v60, %v504
    %506 = vmatpush1.msra.mxu0 %v505
    %507 = vmatprep.subr.mxu0 0.0
    %v508 = vand.u32 %v59, 4294901760
    %v509 = vsub.f32 %v59, %v508
    %510 = vmatpush1.msra.mxu0 %v509
    %511 = vmatprep.subr.mxu0 0.0
    %v512 = vand.u32 %v58, 4294901760
    %v513 = vsub.f32 %v58, %v512
    %514 = vmatpush1.msra.mxu0 %v513
    %515 = vmatprep.subr.mxu0 0.0
    %v516 = vand.u32 %v57, 4294901760
    %v517 = vsub.f32 %v57, %v516
    %518 = vmatpush1.msra.mxu0 %v517
    %519 = vmatprep.subr.mxu0 0.0
    %v520 = vand.u32 %v88, 4294901760
    %v521 = vsub.f32 %v88, %v520
    %522 = vmatpush2.msra.mxu0 %v521
    %523 = vmatprep.subr.mxu0 0.0
    %v524 = vand.u32 %v87, 4294901760
    %v525 = vsub.f32 %v87, %v524
    %526 = vmatpush2.msra.mxu0 %v525
    %527 = vmatprep.subr.mxu0 0.0
    %v528 = vand.u32 %v86, 4294901760
    %v529 = vsub.f32 %v86, %v528
    %530 = vmatpush2.msra.mxu0 %v529
    %531 = vmatprep.subr.mxu0 0.0
    %v532 = vand.u32 %v85, 4294901760
    %v533 = vsub.f32 %v85, %v532
    %534 = vmatpush2.msra.mxu0 %v533
    %535 = vmatprep.subr.mxu0 0.0
    %v536 = vand.u32 %v84, 4294901760
    %v537 = vsub.f32 %v84, %v536
    %538 = vmatpush2.msra.mxu0 %v537
    %539 = vmatprep.subr.mxu0 0.0
    %v540 = vand.u32 %v83, 4294901760
    %v541 = vsub.f32 %v83, %v540
    %542 = vmatpush2.msra.mxu0 %v541
    %543 = vmatprep.subr.mxu0 0.0
    %v544 = vand.u32 %v82, 4294901760
    %v545 = vsub.f32 %v82, %v544
    %546 = vmatpush2.msra.mxu0 %v545
    %547 = vmatprep.subr.mxu0 0.0
    %v548 = vand.u32 %v81, 4294901760
    %v549 = vsub.f32 %v81, %v548
    %550 = vmatpush2.msra.mxu0 %v549
    %551 = vmatprep.subr.mxu0 0.0
    %v552 = vand.u32 %v80, 4294901760
    %v553 = vsub.f32 %v80, %v552
    %554 = vmatpush2.msra.mxu0 %v553
    %555 = vmatprep.subr.mxu0 0.0
    %v556 = vand.u32 %v79, 4294901760
    %v557 = vsub.f32 %v79, %v556
    %558 = vmatpush2.msra.mxu0 %v557
    %559 = vmatprep.subr.mxu0 0.0
    %v560 = vand.u32 %v78, 4294901760
    %v561 = vsub.f32 %v78, %v560
    %562 = vmatpush2.msra.mxu0 %v561
    %563 = vmatprep.subr.mxu0 0.0
    %v564 = vand.u32 %v77, 4294901760
    %v565 = vsub.f32 %v77, %v564
    %566 = vmatpush2.msra.mxu0 %v565
    %567 = vmatprep.subr.mxu0 0.0
    %v568 = vand.u32 %v76, 4294901760
    %v569 = vsub.f32 %v76, %v568
    %570 = vmatpush2.msra.mxu0 %v569
    %571 = vmatprep.subr.mxu0 0.0
    %v572 = vand.u32 %v75, 4294901760
    %v573 = vsub.f32 %v75, %v572
    %574 = vmatpush2.msra.mxu0 %v573
    %575 = vmatprep.subr.mxu0 0.0
    %v576 = vand.u32 %v74, 4294901760
    %v577 = vsub.f32 %v74, %v576
    %578 = vmatpush2.msra.mxu0 %v577
    %579 = vmatprep.subr.mxu0 0.0
    %v580 = vand.u32 %v73, 4294901760
    %v581 = vsub.f32 %v73, %v580
    %582 = vmatpush2.msra.mxu0 %v581
    %v583 = vand.u32 %v54, 4294901760
    %v584 = vsub.f32 %v54, %v583
    %585 = vmatprep.mubr.f32.mxu0 %v584
    %v586 = vand.u32 %v53, 4294901760
    %v587 = vsub.f32 %v53, %v586
    %588 = vmatmul.mubr.f32.gmra.mxu0 %v587
    %v589 = vpop.f32.mrf.mxu0
    %v590 = vadd.f32 %v445, %v589
    %v591 = vpop.f32.mrf.mxu0
    %v592 = vand.u32 %v56, 4294901760
    %v593 = vsub.f32 %v56, %v592
    %594 = vmatprep.mubr.f32.mxu0 %v593
    %v595 = vand.u32 %v55, 4294901760
    %v596 = vsub.f32 %v55, %v595
    %597 = vmatmul.mubr.f32.gmra.mxu0 %v596
    %v598 = vpop.f32.mrf.mxu0
    %v599 = vadd.f32 %v452, %v598
    %v600 = vpop.f32.mrf.mxu0
    %601 = vdwg.mxu0
    %602 = vmatprep.subr.mxu0 0.0
    %v603 = vand.u32 %v72, 4294901760
    %604 = vmatpush1.msra.mxu0 %v603
    %605 = vmatprep.subr.mxu0 0.0
    %v606 = vand.u32 %v71, 4294901760
    %607 = vmatpush1.msra.mxu0 %v606
    %608 = vmatprep.subr.mxu0 0.0
    %v609 = vand.u32 %v70, 4294901760
    %610 = vmatpush1.msra.mxu0 %v609
    %611 = vmatprep.subr.mxu0 0.0
    %v612 = vand.u32 %v69, 4294901760
    %613 = vmatpush1.msra.mxu0 %v612
    %614 = vmatprep.subr.mxu0 0.0
    %v615 = vand.u32 %v68, 4294901760
    %616 = vmatpush1.msra.mxu0 %v615
    %617 = vmatprep.subr.mxu0 0.0
    %v618 = vand.u32 %v67, 4294901760
    %619 = vmatpush1.msra.mxu0 %v618
    %620 = vmatprep.subr.mxu0 0.0
    %v621 = vand.u32 %v66, 4294901760
    %622 = vmatpush1.msra.mxu0 %v621
    %623 = vmatprep.subr.mxu0 0.0
    %v624 = vand.u32 %v65, 4294901760
    %625 = vmatpush1.msra.mxu0 %v624
    %626 = vmatprep.subr.mxu0 0.0
    %v627 = vand.u32 %v64, 4294901760
    %628 = vmatpush1.msra.mxu0 %v627
    %629 = vmatprep.subr.mxu0 0.0
    %v630 = vand.u32 %v63, 4294901760
    %631 = vmatpush1.msra.mxu0 %v630
    %632 = vmatprep.subr.mxu0 0.0
    %v633 = vand.u32 %v62, 4294901760
    %634 = vmatpush1.msra.mxu0 %v633
    %635 = vmatprep.subr.mxu0 0.0
    %v636 = vand.u32 %v61, 4294901760
    %637 = vmatpush1.msra.mxu0 %v636
    %638 = vmatprep.subr.mxu0 0.0
    %v639 = vand.u32 %v60, 4294901760
    %640 = vmatpush1.msra.mxu0 %v639
    %641 = vmatprep.subr.mxu0 0.0
    %v642 = vand.u32 %v59, 4294901760
    %643 = vmatpush1.msra.mxu0 %v642
    %644 = vmatprep.subr.mxu0 0.0
    %v645 = vand.u32 %v58, 4294901760
    %646 = vmatpush1.msra.mxu0 %v645
    %647 = vmatprep.subr.mxu0 0.0
    %v648 = vand.u32 %v57, 4294901760
    %649 = vmatpush1.msra.mxu0 %v648
    %650 = vmatprep.subr.mxu0 0.0
    %v651 = vand.u32 %v88, 4294901760
    %652 = vmatpush2.msra.mxu0 %v651
    %653 = vmatprep.subr.mxu0 0.0
    %v654 = vand.u32 %v87, 4294901760
    %655 = vmatpush2.msra.mxu0 %v654
    %656 = vmatprep.subr.mxu0 0.0
    %v657 = vand.u32 %v86, 4294901760
    %658 = vmatpush2.msra.mxu0 %v657
    %659 = vmatprep.subr.mxu0 0.0
    %v660 = vand.u32 %v85, 4294901760
    %661 = vmatpush2.msra.mxu0 %v660
    %662 = vmatprep.subr.mxu0 0.0
    %v663 = vand.u32 %v84, 4294901760
    %664 = vmatpush2.msra.mxu0 %v663
    %665 = vmatprep.subr.mxu0 0.0
    %v666 = vand.u32 %v83, 4294901760
    %667 = vmatpush2.msra.mxu0 %v666
    %668 = vmatprep.subr.mxu0 0.0
    %v669 = vand.u32 %v82, 4294901760
    %670 = vmatpush2.msra.mxu0 %v669
    %671 = vmatprep.subr.mxu0 0.0
    %v672 = vand.u32 %v81, 4294901760
    %673 = vmatpush2.msra.mxu0 %v672
    %674 = vmatprep.subr.mxu0 0.0
    %v675 = vand.u32 %v80, 4294901760
    %676 = vmatpush2.msra.mxu0 %v675
    %677 = vmatprep.subr.mxu0 0.0
    %v678 = vand.u32 %v79, 4294901760
    %679 = vmatpush2.msra.mxu0 %v678
    %680 = vmatprep.subr.mxu0 0.0
    %v681 = vand.u32 %v78, 4294901760
    %682 = vmatpush2.msra.mxu0 %v681
    %683 = vmatprep.subr.mxu0 0.0
    %v684 = vand.u32 %v77, 4294901760
    %685 = vmatpush2.msra.mxu0 %v684
    %686 = vmatprep.subr.mxu0 0.0
    %v687 = vand.u32 %v76, 4294901760
    %688 = vmatpush2.msra.mxu0 %v687
    %689 = vmatprep.subr.mxu0 0.0
    %v690 = vand.u32 %v75, 4294901760
    %691 = vmatpush2.msra.mxu0 %v690
    %692 = vmatprep.subr.mxu0 0.0
    %v693 = vand.u32 %v74, 4294901760
    %694 = vmatpush2.msra.mxu0 %v693
    %695 = vmatprep.subr.mxu0 0.0
    %v696 = vand.u32 %v73, 4294901760
    %697 = vmatpush2.msra.mxu0 %v696
    %v698 = vand.u32 %v54, 4294901760
    %v699 = vsub.f32 %v54, %v698
    %v700 = vand.u32 %v699, 4294901760
    %701 = vmatprep.mubr.f32.mxu0 %v700
    %v702 = vand.u32 %v53, 4294901760
    %v703 = vsub.f32 %v53, %v702
    %v704 = vand.u32 %v703, 4294901760
    %705 = vmatmul.mubr.f32.gmra.mxu0 %v704
    %v706 = vpop.f32.mrf.mxu0
    %v707 = vadd.f32 %v590, %v706
    %v708 = vpop.f32.mrf.mxu0
    %v709 = vand.u32 %v56, 4294901760
    %v710 = vsub.f32 %v56, %v709
    %v711 = vand.u32 %v710, 4294901760
    %712 = vmatprep.mubr.f32.mxu0 %v711
    %v713 = vand.u32 %v55, 4294901760
    %v714 = vsub.f32 %v55, %v713
    %v715 = vand.u32 %v714, 4294901760
    %716 = vmatmul.mubr.f32.gmra.mxu0 %v715
    %v717 = vpop.f32.mrf.mxu0
    %v718 = vadd.f32 %v599, %v717
    %v719 = vpop.f32.mrf.mxu0
    %720 = vdwg.mxu0
    %721 = vmatprep.subr.mxu0 0.0
    %v722 = vand.u32 %v72, 4294901760
    %v723 = vsub.f32 %v72, %v722
    %v724 = vand.u32 %v723, 4294901760
    %725 = vmatpush1.msra.mxu0 %v724
    %726 = vmatprep.subr.mxu0 0.0
    %v727 = vand.u32 %v71, 4294901760
    %v728 = vsub.f32 %v71, %v727
    %v729 = vand.u32 %v728, 4294901760
    %730 = vmatpush1.msra.mxu0 %v729
    %731 = vmatprep.subr.mxu0 0.0
    %v732 = vand.u32 %v70, 4294901760
    %v733 = vsub.f32 %v70, %v732
    %v734 = vand.u32 %v733, 4294901760
    %735 = vmatpush1.msra.mxu0 %v734
    %736 = vmatprep.subr.mxu0 0.0
    %v737 = vand.u32 %v69, 4294901760
    %v738 = vsub.f32 %v69, %v737
    %v739 = vand.u32 %v738, 4294901760
    %740 = vmatpush1.msra.mxu0 %v739
    %741 = vmatprep.subr.mxu0 0.0
    %v742 = vand.u32 %v68, 4294901760
    %v743 = vsub.f32 %v68, %v742
    %v744 = vand.u32 %v743, 4294901760
    %745 = vmatpush1.msra.mxu0 %v744
    %746 = vmatprep.subr.mxu0 0.0
    %v747 = vand.u32 %v67, 4294901760
    %v748 = vsub.f32 %v67, %v747
    %v749 = vand.u32 %v748, 4294901760
    %750 = vmatpush1.msra.mxu0 %v749
    %751 = vmatprep.subr.mxu0 0.0
    %v752 = vand.u32 %v66, 4294901760
    %v753 = vsub.f32 %v66, %v752
    %v754 = vand.u32 %v753, 4294901760
    %755 = vmatpush1.msra.mxu0 %v754
    %756 = vmatprep.subr.mxu0 0.0
    %v757 = vand.u32 %v65, 4294901760
    %v758 = vsub.f32 %v65, %v757
    %v759 = vand.u32 %v758, 4294901760
    %760 = vmatpush1.msra.mxu0 %v759
    %761 = vmatprep.subr.mxu0 0.0
    %v762 = vand.u32 %v64, 4294901760
    %v763 = vsub.f32 %v64, %v762
    %v764 = vand.u32 %v763, 4294901760
    %765 = vmatpush1.msra.mxu0 %v764
    %766 = vmatprep.subr.mxu0 0.0
    %v767 = vand.u32 %v63, 4294901760
    %v768 = vsub.f32 %v63, %v767
    %v769 = vand.u32 %v768, 4294901760
    %770 = vmatpush1.msra.mxu0 %v769
    %771 = vmatprep.subr.mxu0 0.0
    %v772 = vand.u32 %v62, 4294901760
    %v773 = vsub.f32 %v62, %v772
    %v774 = vand.u32 %v773, 4294901760
    %775 = vmatpush1.msra.mxu0 %v774
    %776 = vmatprep.subr.mxu0 0.0
    %v777 = vand.u32 %v61, 4294901760
    %v778 = vsub.f32 %v61, %v777
    %v779 = vand.u32 %v778, 4294901760
    %780 = vmatpush1.msra.mxu0 %v779
    %781 = vmatprep.subr.mxu0 0.0
    %v782 = vand.u32 %v60, 4294901760
    %v783 = vsub.f32 %v60, %v782
    %v784 = vand.u32 %v783, 4294901760
    %785 = vmatpush1.msra.mxu0 %v784
    %786 = vmatprep.subr.mxu0 0.0
    %v787 = vand.u32 %v59, 4294901760
    %v788 = vsub.f32 %v59, %v787
    %v789 = vand.u32 %v788, 4294901760
    %790 = vmatpush1.msra.mxu0 %v789
    %791 = vmatprep.subr.mxu0 0.0
    %v792 = vand.u32 %v58, 4294901760
    %v793 = vsub.f32 %v58, %v792
    %v794 = vand.u32 %v793, 4294901760
    %795 = vmatpush1.msra.mxu0 %v794
    %796 = vmatprep.subr.mxu0 0.0
    %v797 = vand.u32 %v57, 4294901760
    %v798 = vsub.f32 %v57, %v797
    %v799 = vand.u32 %v798, 4294901760
    %800 = vmatpush1.msra.mxu0 %v799
    %801 = vmatprep.subr.mxu0 0.0
    %v802 = vand.u32 %v88, 4294901760
    %v803 = vsub.f32 %v88, %v802
    %v804 = vand.u32 %v803, 4294901760
    %805 = vmatpush2.msra.mxu0 %v804
    %806 = vmatprep.subr.mxu0 0.0
    %v807 = vand.u32 %v87, 4294901760
    %v808 = vsub.f32 %v87, %v807
    %v809 = vand.u32 %v808, 4294901760
    %810 = vmatpush2.msra.mxu0 %v809
    %811 = vmatprep.subr.mxu0 0.0
    %v812 = vand.u32 %v86, 4294901760
    %v813 = vsub.f32 %v86, %v812
    %v814 = vand.u32 %v813, 4294901760
    %815 = vmatpush2.msra.mxu0 %v814
    %816 = vmatprep.subr.mxu0 0.0
    %v817 = vand.u32 %v85, 4294901760
    %v818 = vsub.f32 %v85, %v817
    %v819 = vand.u32 %v818, 4294901760
    %820 = vmatpush2.msra.mxu0 %v819
    %821 = vmatprep.subr.mxu0 0.0
    %v822 = vand.u32 %v84, 4294901760
    %v823 = vsub.f32 %v84, %v822
    %v824 = vand.u32 %v823, 4294901760
    %825 = vmatpush2.msra.mxu0 %v824
    %826 = vmatprep.subr.mxu0 0.0
    %v827 = vand.u32 %v83, 4294901760
    %v828 = vsub.f32 %v83, %v827
    %v829 = vand.u32 %v828, 4294901760
    %830 = vmatpush2.msra.mxu0 %v829
    %831 = vmatprep.subr.mxu0 0.0
    %v832 = vand.u32 %v82, 4294901760
    %v833 = vsub.f32 %v82, %v832
    %v834 = vand.u32 %v833, 4294901760
    %835 = vmatpush2.msra.mxu0 %v834
    %836 = vmatprep.subr.mxu0 0.0
    %v837 = vand.u32 %v81, 4294901760
    %v838 = vsub.f32 %v81, %v837
    %v839 = vand.u32 %v838, 4294901760
    %840 = vmatpush2.msra.mxu0 %v839
    %841 = vmatprep.subr.mxu0 0.0
    %v842 = vand.u32 %v80, 4294901760
    %v843 = vsub.f32 %v80, %v842
    %v844 = vand.u32 %v843, 4294901760
    %845 = vmatpush2.msra.mxu0 %v844
    %846 = vmatprep.subr.mxu0 0.0
    %v847 = vand.u32 %v79, 4294901760
    %v848 = vsub.f32 %v79, %v847
    %v849 = vand.u32 %v848, 4294901760
    %850 = vmatpush2.msra.mxu0 %v849
    %851 = vmatprep.subr.mxu0 0.0
    %v852 = vand.u32 %v78, 4294901760
    %v853 = vsub.f32 %v78, %v852
    %v854 = vand.u32 %v853, 4294901760
    %855 = vmatpush2.msra.mxu0 %v854
    %856 = vmatprep.subr.mxu0 0.0
    %v857 = vand.u32 %v77, 4294901760
    %v858 = vsub.f32 %v77, %v857
    %v859 = vand.u32 %v858, 4294901760
    %860 = vmatpush2.msra.mxu0 %v859
    %861 = vmatprep.subr.mxu0 0.0
    %v862 = vand.u32 %v76, 4294901760
    %v863 = vsub.f32 %v76, %v862
    %v864 = vand.u32 %v863, 4294901760
    %865 = vmatpush2.msra.mxu0 %v864
    %866 = vmatprep.subr.mxu0 0.0
    %v867 = vand.u32 %v75, 4294901760
    %v868 = vsub.f32 %v75, %v867
    %v869 = vand.u32 %v868, 4294901760
    %870 = vmatpush2.msra.mxu0 %v869
    %871 = vmatprep.subr.mxu0 0.0
    %v872 = vand.u32 %v74, 4294901760
    %v873 = vsub.f32 %v74, %v872
    %v874 = vand.u32 %v873, 4294901760
    %875 = vmatpush2.msra.mxu0 %v874
    %876 = vmatprep.subr.mxu0 0.0
    %v877 = vand.u32 %v73, 4294901760
    %v878 = vsub.f32 %v73, %v877
    %v879 = vand.u32 %v878, 4294901760
    %880 = vmatpush2.msra.mxu0 %v879
    %v881 = vand.u32 %v54, 4294901760
    %882 = vmatprep.mubr.f32.mxu0 %v881
    %v883 = vand.u32 %v53, 4294901760
    %884 = vmatmul.mubr.f32.gmra.mxu0 %v883
    %v885 = vpop.f32.mrf.mxu0
    %v886 = vadd.f32 %v707, %v885
    %v887 = vpop.f32.mrf.mxu0
    %v888 = vand.u32 %v56, 4294901760
    %889 = vmatprep.mubr.f32.mxu0 %v888
    %v890 = vand.u32 %v55, 4294901760
    %891 = vmatmul.mubr.f32.gmra.mxu0 %v890
    %v892 = vpop.f32.mrf.mxu0
    %v893 = vadd.f32 %v718, %v892
    %v894 = vpop.f32.mrf.mxu0
    %895 = vdwg.mxu0
    %896 = vmatprep.subr.mxu0 0.0
    %v897 = vand.u32 %v72, 4294901760
    %898 = vmatpush1.msra.mxu0 %v897
    %899 = vmatprep.subr.mxu0 0.0
    %v900 = vand.u32 %v71, 4294901760
    %901 = vmatpush1.msra.mxu0 %v900
    %902 = vmatprep.subr.mxu0 0.0
    %v903 = vand.u32 %v70, 4294901760
    %904 = vmatpush1.msra.mxu0 %v903
    %905 = vmatprep.subr.mxu0 0.0
    %v906 = vand.u32 %v69, 4294901760
    %907 = vmatpush1.msra.mxu0 %v906
    %908 = vmatprep.subr.mxu0 0.0
    %v909 = vand.u32 %v68, 4294901760
    %910 = vmatpush1.msra.mxu0 %v909
    %911 = vmatprep.subr.mxu0 0.0
    %v912 = vand.u32 %v67, 4294901760
    %913 = vmatpush1.msra.mxu0 %v912
    %914 = vmatprep.subr.mxu0 0.0
    %v915 = vand.u32 %v66, 4294901760
    %916 = vmatpush1.msra.mxu0 %v915
    %917 = vmatprep.subr.mxu0 0.0
    %v918 = vand.u32 %v65, 4294901760
    %919 = vmatpush1.msra.mxu0 %v918
    %920 = vmatprep.subr.mxu0 0.0
    %v921 = vand.u32 %v64, 4294901760
    %922 = vmatpush1.msra.mxu0 %v921
    %923 = vmatprep.subr.mxu0 0.0
    %v924 = vand.u32 %v63, 4294901760
    %925 = vmatpush1.msra.mxu0 %v924
    %926 = vmatprep.subr.mxu0 0.0
    %v927 = vand.u32 %v62, 4294901760
    %928 = vmatpush1.msra.mxu0 %v927
    %929 = vmatprep.subr.mxu0 0.0
    %v930 = vand.u32 %v61, 4294901760
    %931 = vmatpush1.msra.mxu0 %v930
    %932 = vmatprep.subr.mxu0 0.0
    %v933 = vand.u32 %v60, 4294901760
    %934 = vmatpush1.msra.mxu0 %v933
    %935 = vmatprep.subr.mxu0 0.0
    %v936 = vand.u32 %v59, 4294901760
    %937 = vmatpush1.msra.mxu0 %v936
    %938 = vmatprep.subr.mxu0 0.0
    %v939 = vand.u32 %v58, 4294901760
    %940 = vmatpush1.msra.mxu0 %v939
    %941 = vmatprep.subr.mxu0 0.0
    %v942 = vand.u32 %v57, 4294901760
    %943 = vmatpush1.msra.mxu0 %v942
    %944 = vmatprep.subr.mxu0 0.0
    %v945 = vand.u32 %v88, 4294901760
    %946 = vmatpush2.msra.mxu0 %v945
    %947 = vmatprep.subr.mxu0 0.0
    %v948 = vand.u32 %v87, 4294901760
    %949 = vmatpush2.msra.mxu0 %v948
    %950 = vmatprep.subr.mxu0 0.0
    %v951 = vand.u32 %v86, 4294901760
    %952 = vmatpush2.msra.mxu0 %v951
    %953 = vmatprep.subr.mxu0 0.0
    %v954 = vand.u32 %v85, 4294901760
    %955 = vmatpush2.msra.mxu0 %v954
    %956 = vmatprep.subr.mxu0 0.0
    %v957 = vand.u32 %v84, 4294901760
    %958 = vmatpush2.msra.mxu0 %v957
    %959 = vmatprep.subr.mxu0 0.0
    %v960 = vand.u32 %v83, 4294901760
    %961 = vmatpush2.msra.mxu0 %v960
    %962 = vmatprep.subr.mxu0 0.0
    %v963 = vand.u32 %v82, 4294901760
    %964 = vmatpush2.msra.mxu0 %v963
    %965 = vmatprep.subr.mxu0 0.0
    %v966 = vand.u32 %v81, 4294901760
    %967 = vmatpush2.msra.mxu0 %v966
    %968 = vmatprep.subr.mxu0 0.0
    %v969 = vand.u32 %v80, 4294901760
    %970 = vmatpush2.msra.mxu0 %v969
    %971 = vmatprep.subr.mxu0 0.0
    %v972 = vand.u32 %v79, 4294901760
    %973 = vmatpush2.msra.mxu0 %v972
    %974 = vmatprep.subr.mxu0 0.0
    %v975 = vand.u32 %v78, 4294901760
    %976 = vmatpush2.msra.mxu0 %v975
    %977 = vmatprep.subr.mxu0 0.0
    %v978 = vand.u32 %v77, 4294901760
    %979 = vmatpush2.msra.mxu0 %v978
    %980 = vmatprep.subr.mxu0 0.0
    %v981 = vand.u32 %v76, 4294901760
    %982 = vmatpush2.msra.mxu0 %v981
    %983 = vmatprep.subr.mxu0 0.0
    %v984 = vand.u32 %v75, 4294901760
    %985 = vmatpush2.msra.mxu0 %v984
    %986 = vmatprep.subr.mxu0 0.0
    %v987 = vand.u32 %v74, 4294901760
    %988 = vmatpush2.msra.mxu0 %v987
    %989 = vmatprep.subr.mxu0 0.0
    %v990 = vand.u32 %v73, 4294901760
    %991 = vmatpush2.msra.mxu0 %v990
    %v992 = vand.u32 %v54, 4294901760
    %993 = vmatprep.mubr.f32.mxu0 %v992
    %v994 = vand.u32 %v53, 4294901760
    %995 = vmatmul.mubr.f32.gmra.mxu0 %v994
    %v996 = vpop.f32.mrf.mxu0
    %v997 = vadd.f32 %v886, %v996
    %v998 = vpop.f32.mrf.mxu0
    %v999 = vand.u32 %v56, 4294901760
    %1000 = vmatprep.mubr.f32.mxu0 %v999
    %v1001 = vand.u32 %v55, 4294901760
    %1002 = vmatmul.mubr.f32.gmra.mxu0 %v1001
    %v1003 = vpop.f32.mrf.mxu0
    %v1004 = vadd.f32 %v893, %v1003
    %v1005 = vpop.f32.mrf.mxu0
    %1006 = vdwg.mxu0
    %v1007 = vmul.f32 %v997, 11.313708
    %v1008 = vmul.f32 %v1004, 11.313708
    %1009 = vst [vmem:[#allocation5] sm:$0xff] %v1007
    %1010 = vst [vmem:[#allocation5 + $0x8] sm:$0xff] %v1008
    // Predicated region
    $region14: #{tpu_custom_call.1} parent=1 // pred_check
      _
    $region15: #{tpu_custom_call.1} parent=1 // pred_check_branch
      %1012 = sbr.rel (0) target = $region17
    $region16: #{tpu_custom_call.1} parent=1 // pred_region
      %s1014 = ssub.s32 256, 256
      %1015 = vsyncadd [#allocation4], %s1014
      %s1016 = sshll.u32 [#allocation5], 4
      %s1017 = int_to_ptr.vmem [resolvable:$true] %s1016
      %1022 = dma.vmem_to_hbm [thread:$0]  %s1017, 256, %s2, [#allocation4], 128, 128, 8
    $region17: #{tpu_custom_call.1} parent=1 // pred_fallthru
      _
    // Predicated region
    $region18: #{tpu_custom_call.1} parent=1 // pred_check
      _
    $region19: #{tpu_custom_call.1} parent=1 // pred_check_branch
      %1024 = sbr.rel (0) target = $region21
    $region20: #{tpu_custom_call.1} parent=1 // pred_region
      %1025 = dma.done [#allocation4], 256
    $region21: #{tpu_custom_call.1} parent=1 // pred_fallthru
      _
    %1026 = vsyncpa [#allocation3], 1
    %1027 = vsyncpa [#allocation4], 1

</llo_original>
